<compile_context>
chip_gen: v7x
topology: tpu7x:2x2x1
jax: 0.10.0
libtpu: 0.0.40
codegen_flags: <defaults>
</compile_context>

<pallas_src>
import functools

import jax
import jax.numpy as jnp
from jax.experimental import pallas as pl
from jax.experimental.pallas import tpu as pltpu


def _focal_loss_kernel(x_ref, t_ref, a_ref, out_ref, acc_ref, *,
                       gamma, n_rows, hw, mask_rows, mask_cols):
    """One (BN, C, TILE) block: masked softmax stats over the class (sublane)
    axis, one-hot gather of the target class, focal weighting, lane-wise
    accumulation into a (1, TILE) scratch; per-ni partial sum on last ji."""
    ni = pl.program_id(0)
    ji = pl.program_id(1)

    @pl.when(ji == 0)
    def _():
        acc_ref[...] = jnp.zeros_like(acc_ref)

    x = x_ref[...].astype(jnp.float32)            # (BN, C, T)  rows on lanes
    bn, c, t = x.shape
    tgt = t_ref[...]                              # (BN, 1, T)  int32

    # Ragged-edge masks (static flags: only emitted when the grid is ragged).
    valid = None
    if mask_cols:
        col = jax.lax.broadcasted_iota(jnp.int32, (bn, 1, t), 2)
        valid = col < (hw - ji * t)
    if mask_rows:
        row = jax.lax.broadcasted_iota(jnp.int32, (bn, 1, t), 0)
        rvalid = row < (n_rows - ni * bn)
        valid = rvalid if valid is None else jnp.logical_and(valid, rvalid)
    if valid is not None:
        # Mask x BEFORE max/exp: undefined OOB block reads may hold Inf/NaN.
        x = jnp.where(valid, x, 0.0)

    # Numerically stable softmax stats over the class axis (sublanes).
    m = jnp.max(x, axis=1, keepdims=True)         # (BN, 1, T)
    z = x - m
    ez = jnp.exp(z)                               # (BN, C, T)
    sum_ez = jnp.sum(ez, axis=1, keepdims=True)   # (BN, 1, T)

    # One-hot gather of the target class (class index runs along sublanes).
    cls = jax.lax.broadcasted_iota(jnp.int32, (bn, c, t), 1)
    hit = cls == tgt                              # (BN, C, T) bool
    z_t = jnp.sum(jnp.where(hit, z, 0.0), axis=1, keepdims=True)    # (BN,1,T)
    e_t = jnp.sum(jnp.where(hit, ez, 0.0), axis=1, keepdims=True)   # (BN,1,T)
    at = jnp.sum(jnp.where(hit, a_ref[...], 0.0), axis=1, keepdims=True)

    logpt = z_t - jnp.log(sum_ez)                 # log p_t
    pt = e_t / sum_ez                             # p_t  (reuses exp(z))

    one_minus = 1.0 - pt
    g = float(gamma)
    if g.is_integer() and 0 <= int(g) <= 8:
        # Integer gamma: unrolled VALU multiplies (also fixes 0**0 -> NaN).
        w = jnp.ones_like(pt)
        for _ in range(int(g)):
            w = w * one_minus
    else:
        # Fractional gamma: keep (1-pt)==0 away from log(0).
        safe = jnp.maximum(one_minus, jnp.float32(1e-30))
        w = jnp.where(one_minus > 0.0, jnp.power(safe, g), 0.0)

    loss = -at * w * logpt                        # (BN, 1, T)
    if valid is not None:
        loss = jnp.where(valid, loss, 0.0)

    acc_ref[...] += jnp.sum(loss, axis=0)         # (1, T) lane accumulator

    @pl.when(ji == pl.num_programs(1) - 1)
    def _():
        # Per-ni partial sum, broadcast across one lane-dense (1,128) block.
        partial = jnp.sum(acc_ref[...])
        out_ref[...] = jnp.zeros((1, 128), jnp.float32) + partial


def _round_up(x, m):
    return ((x + m - 1) // m) * m


def focal_loss(logits, target, *, gamma=0.0, alpha=None, size_average=True,
               max_tile_lanes=32768, target_block_bytes=4 << 20,
               vmem_budget_bytes=20 << 20):
    """JAX/Pallas equivalent of FocalLoss.forward(input, target)."""
    # --- reshape to (N, C, HW); NCHW needs no transpose (loss is row-order
    #     invariant).  2-D (M, C) inputs are transposed once to (1, C, M). ---
    if logits.ndim > 2:
        n, c = logits.shape[0], logits.shape[1]
        x = logits.reshape(n, c, -1)              # (N, C, H*W)
    else:
        c = logits.shape[1]
        x = jnp.transpose(logits, (1, 0))[None, :, :]   # (1, C, M)
        n = 1
    hw = x.shape[2]
    t = target.reshape(n, 1, hw).astype(jnp.int32)

    # --- alpha handling (same semantics as the PyTorch __init__) ---
    if alpha is None:
        a = jnp.ones((1, c, 1), jnp.float32)      # no alpha weighting
    elif isinstance(alpha, (float, int)):
        if c != 2:
            raise ValueError("scalar alpha implies binary classification (C==2)")
        a = jnp.asarray([alpha, 1.0 - alpha], jnp.float32).reshape(1, 2, 1)
    else:
        a = jnp.asarray(alpha, jnp.float32).reshape(1, c, 1)

    # --- tiling: lane tile along HW (multiple of 128), multi-row bn blocks,
    #     both allowed ragged (masked in-kernel), sized against a VMEM budget
    #     that includes sublane padding of C and of the int32 targets. ---
    ebytes = jnp.dtype(x.dtype).itemsize
    sub = max(8, 32 // max(ebytes, 1))            # sublane packing of class axis
    tile = min(_round_up(hw, 128), max(128, (max_tile_lanes // 128) * 128))
    bn = max(1, min(n, target_block_bytes // max(c * tile * ebytes, 1)))

    def vmem_est(bn_, tile_):
        c_pad = _round_up(c, sub)
        return (2 * bn_ * c_pad * tile_ * ebytes   # logits, double-buffered
                + 2 * bn_ * 8 * tile_ * 4          # int32 targets (sublane pad)
                + 8 * tile_ * 4                    # (1, tile) f32 accumulator
                + 4 * 8 * 128 * 4)                 # alpha + output blocks

    while vmem_est(bn, tile) > vmem_budget_bytes and (bn > 1 or tile > 128):
        if bn > 1:
            bn = max(1, bn // 2)
        else:
            tile = max(128, _round_up(tile // 2, 128))

    grid_n = pl.cdiv(n, bn)
    grid_j = pl.cdiv(hw, tile)
    mask_cols = (hw % tile) != 0
    mask_rows = (n % bn) != 0
    # Stay under v7x's 64 MiB/TC while lifting v5e's 16 MiB scoped default.
    vmem_limit = int(min(48 << 20, max(32 << 20, 2 * vmem_est(bn, tile))))

    out = pl.pallas_call(
        functools.partial(_focal_loss_kernel, gamma=float(gamma), n_rows=n,
                          hw=hw, mask_rows=mask_rows, mask_cols=mask_cols),
        out_shape=jax.ShapeDtypeStruct((1, grid_n * 128), jnp.float32),
        grid_spec=pltpu.PrefetchScalarGridSpec(
            num_scalar_prefetch=0,
            grid=(grid_n, grid_j),
            in_specs=[
                pl.BlockSpec((bn, c, tile), lambda ni, ji: (ni, 0, ji)),  # logits
                pl.BlockSpec((bn, 1, tile), lambda ni, ji: (ni, 0, ji)),  # targets
                pl.BlockSpec((1, c, 1), lambda ni, ji: (0, 0, 0)),        # alpha
            ],
            out_specs=pl.BlockSpec((1, 128), lambda ni, ji: (0, ni)),     # per-ni partial
            scratch_shapes=[pltpu.VMEM((1, tile), jnp.float32)],          # lane acc
        ),
        compiler_params=pltpu.CompilerParams(
            dimension_semantics=("parallel", "arbitrary"),
            vmem_limit_bytes=vmem_limit),
    )(x, t, a)

    partials = out.reshape(grid_n, 128)[:, 0]     # each block holds one scalar
    total = jnp.sum(partials)
    if size_average:
        return total / jnp.float32(n * hw)        # mean over real rows only
    return total


def _reference(logits, target, gamma, alpha, size_average):
    """Pure-JAX reference (mirrors the PyTorch forward) for a sanity check."""
    if logits.ndim > 2:
        n, c = logits.shape[0], logits.shape[1]
        x = jnp.transpose(logits.reshape(n, c, -1), (0, 2, 1)).reshape(-1, c)
    else:
        x = logits
        c = logits.shape[1]
    t = target.reshape(-1)
    logp = jax.nn.log_softmax(x, axis=1)
    logpt = jnp.take_along_axis(logp, t[:, None], axis=1)[:, 0]
    pt = jnp.exp(logpt)
    if alpha is not None:
        at = jnp.asarray(alpha, jnp.float32)[t]
        logpt = logpt * at
    loss = -((1.0 - pt) ** gamma) * logpt
    return loss.mean() if size_average else loss.sum()


if __name__ == "__main__":
    key = jax.random.PRNGKey(0)
    k1, k2, k3, k4, k5, k6 = jax.random.split(key, 6)

    # --- case 1: NCHW, per-class alpha, integer gamma, fully aligned ---
    N, C, H, W = 2, 4, 16, 16                     # HW = 256..512 rows per image
    logits = jax.random.normal(k1, (N, C, H, W), dtype=jnp.float32)
    target = jax.random.randint(k2, (N, H, W), 0, C, dtype=jnp.int32)
    alpha = [0.1, 0.2, 0.3, 0.4]

    out = focal_loss(logits, target, gamma=2.0, alpha=alpha, size_average=True)
    out = jax.block_until_ready(out)
    ref = _reference(logits, target, 2.0, alpha, True)
    assert jnp.allclose(out, ref, rtol=1e-5, atol=1e-6), (out, ref)

    # --- case 2: ragged HW (in-kernel lane mask path, no pad copy), no alpha,
    #             fractional gamma ---
    N2, C2, H2, W2 = 2, 4, 15, 10                 # HW = 150, not a 128 multiple
    logits2 = jax.random.normal(k3, (N2, C2, H2, W2), dtype=jnp.float32)
    target2 = jax.random.randint(k4, (N2, H2, W2), 0, C2, dtype=jnp.int32)

    out2 = focal_loss(logits2, target2, gamma=1.5, alpha=None, size_average=True)
    out2 = jax.block_until_ready(out2)
    ref2 = _reference(logits2, target2, 1.5, None, True)
    assert jnp.allclose(out2, ref2, rtol=1e-5, atol=1e-6), (out2, ref2)

    # --- case 3: multi-block grid with ragged batch AND ragged HW, per-ni
    #             partial sums, sum reduction (size_average=False) ---
    N3, C3, H3, W3 = 3, 4, 16, 20                 # HW = 320 = 2*128 + 64
    logits3 = jax.random.normal(k5, (N3, C3, H3, W3), dtype=jnp.float32)
    target3 = jax.random.randint(k6, (N3, H3, W3), 0, C3, dtype=jnp.int32)

    out3 = focal_loss(logits3, target3, gamma=2.0, alpha=alpha,
                      size_average=False,
                      max_tile_lanes=128, target_block_bytes=4096)  # force bn=2, 2x3 grid
    out3 = jax.block_until_ready(out3)
    ref3 = _reference(logits3, target3, 2.0, alpha, False)
    assert jnp.allclose(out3, ref3, rtol=1e-5, atol=1e-4), (out3, ref3)

    print("KERNEL_OK")
</pallas_src>

<mosaic_0001>
module attributes {stable_mosaic.version = 11 : i64} {
  func.func @_focal_loss_kernel(%arg0: i32, %arg1: i32, %arg2: memref<2x4x256xf32, #tpu.memory_space<vmem>>, %arg3: memref<2x1x256xi32, #tpu.memory_space<vmem>>, %arg4: memref<1x4x1xf32, #tpu.memory_space<vmem>>, %arg5: memref<1x128xf32, #tpu.memory_space<vmem>>, %arg6: memref<1x256xf32, #tpu.memory_space<vmem>>) attributes {dimension_semantics = [#tpu.dimension_semantics<parallel>, #tpu.dimension_semantics<arbitrary>], iteration_bounds = array<i64: 1, 1>, scalar_prefetch = 0 : i64, scratch_operands = 1 : i64, tpu.core_type = #tpu.core_type<tc>, window_params = [{transform_indices = @transform_0, window_bounds = array<i64: 2, 4, 256>}, {transform_indices = @transform_1, window_bounds = array<i64: 2, 1, 256>}, {pipeline_mode = #tpu.pipeline_mode<synchronous>, transform_indices = @transform_2, window_bounds = array<i64: 1, 4, 1>}, {transform_indices = @transform_3, window_bounds = array<i64: 1, 128>}]} {
    %c0_i32 = arith.constant 0 : i32
    %0 = arith.cmpi eq, %arg1, %c0_i32 : i32
    %1 = arith.extui %0 : i1 to i32
    %c0_i32_0 = arith.constant 0 : i32
    %2 = arith.cmpi ne, %1, %c0_i32_0 : i32
    scf.if %2 {
      %cst_26 = arith.constant 0.000000e+00 : f32
      %49 = vector.broadcast %cst_26 : f32 to vector<1x256xf32>
      %c0_27 = arith.constant 0 : index
      %c0_28 = arith.constant 0 : index
      %50 = vector.load %arg6[%c0_27, %c0_28] : memref<1x256xf32, #tpu.memory_space<vmem>>, vector<1x256xf32>
      tpu.vector_store %arg6[%c0_27, %c0_28], %49 {strides = array<i32>} : memref<1x256xf32, #tpu.memory_space<vmem>>, vector<1x256xf32>,
    } else {
    }
    %c0 = arith.constant 0 : index
    %c0_1 = arith.constant 0 : index
    %c0_2 = arith.constant 0 : index
    %3 = vector.load %arg2[%c0, %c0_1, %c0_2] : memref<2x4x256xf32, #tpu.memory_space<vmem>>, vector<2x4x256xf32>
    %c0_3 = arith.constant 0 : index
    %c0_4 = arith.constant 0 : index
    %c0_5 = arith.constant 0 : index
    %4 = vector.load %arg3[%c0_3, %c0_4, %c0_5] : memref<2x1x256xi32, #tpu.memory_space<vmem>>, vector<2x1x256xi32>
    %cst = arith.constant dense<0xFF800000> : vector<2x256xf32>
    %5 = vector.multi_reduction <maximumf>, %3, %cst [1] : vector<2x4x256xf32> to vector<2x256xf32>
    %6 = vector.shape_cast %5 : vector<2x256xf32> to vector<2x1x256xf32>
    %7 = vector.broadcast %6 : vector<2x1x256xf32> to vector<2x4x256xf32>
    %8 = arith.subf %3, %7 : vector<2x4x256xf32>
    %9 = math.exp %8 : vector<2x4x256xf32>
    %cst_6 = arith.constant dense<0.000000e+00> : vector<2x256xf32>
    %10 = vector.multi_reduction <add>, %9, %cst_6 [1] : vector<2x4x256xf32> to vector<2x256xf32>
    %11 = vector.shape_cast %10 : vector<2x256xf32> to vector<2x1x256xf32>
    %12 = tpu.iota {dimensions = array<i32: 1>} : vector<2x4x256xi32>
    %13 = vector.broadcast %4 : vector<2x1x256xi32> to vector<2x4x256xi32>
    %14 = arith.cmpi eq, %12, %13 : vector<2x4x256xi32>
    %cst_7 = arith.constant 0.000000e+00 : f32
    %15 = vector.broadcast %cst_7 : f32 to vector<2x4x256xf32>
    %16 = arith.select %14, %8, %15 : vector<2x4x256xi1>, vector<2x4x256xf32>
    %cst_8 = arith.constant dense<0.000000e+00> : vector<2x256xf32>
    %17 = vector.multi_reduction <add>, %16, %cst_8 [1] : vector<2x4x256xf32> to vector<2x256xf32>
    %18 = vector.shape_cast %17 : vector<2x256xf32> to vector<2x1x256xf32>
    %cst_9 = arith.constant 0.000000e+00 : f32
    %19 = vector.broadcast %cst_9 : f32 to vector<2x4x256xf32>
    %20 = arith.select %14, %9, %19 : vector<2x4x256xi1>, vector<2x4x256xf32>
    %cst_10 = arith.constant dense<0.000000e+00> : vector<2x256xf32>
    %21 = vector.multi_reduction <add>, %20, %cst_10 [1] : vector<2x4x256xf32> to vector<2x256xf32>
    %22 = vector.shape_cast %21 : vector<2x256xf32> to vector<2x1x256xf32>
    %c0_11 = arith.constant 0 : index
    %c0_12 = arith.constant 0 : index
    %c0_13 = arith.constant 0 : index
    %23 = vector.load %arg4[%c0_11, %c0_12, %c0_13] : memref<1x4x1xf32, #tpu.memory_space<vmem>>, vector<1x4x1xf32>
    %cst_14 = arith.constant 0.000000e+00 : f32
    %24 = vector.shape_cast %23 : vector<1x4x1xf32> to vector<1x4x1xf32>
    %25 = vector.broadcast %24 : vector<1x4x1xf32> to vector<2x4x256xf32>
    %26 = vector.broadcast %cst_14 : f32 to vector<2x4x256xf32>
    %27 = arith.select %14, %25, %26 : vector<2x4x256xi1>, vector<2x4x256xf32>
    %cst_15 = arith.constant dense<0.000000e+00> : vector<2x256xf32>
    %28 = vector.multi_reduction <add>, %27, %cst_15 [1] : vector<2x4x256xf32> to vector<2x256xf32>
    %29 = vector.shape_cast %28 : vector<2x256xf32> to vector<2x1x256xf32>
    %30 = math.log %11 : vector<2x1x256xf32>
    %31 = arith.subf %18, %30 : vector<2x1x256xf32>
    %32 = arith.divf %22, %11 : vector<2x1x256xf32>
    %cst_16 = arith.constant 1.000000e+00 : f32
    %33 = vector.broadcast %cst_16 : f32 to vector<2x1x256xf32>
    %34 = arith.subf %33, %32 : vector<2x1x256xf32>
    %cst_17 = arith.constant 1.000000e+00 : f32
    %35 = vector.broadcast %cst_17 : f32 to vector<2x1x256xf32>
    %36 = arith.mulf %35, %34 : vector<2x1x256xf32>
    %37 = arith.mulf %36, %34 : vector<2x1x256xf32>
    %cst_18 = arith.constant 0.000000e+00 : f32
    %38 = vector.broadcast %cst_18 : f32 to vector<2x1x256xf32>
    %39 = arith.subf %38, %29 : vector<2x1x256xf32>
    %40 = arith.mulf %39, %37 : vector<2x1x256xf32>
    %41 = arith.mulf %40, %31 : vector<2x1x256xf32>
    %c0_19 = arith.constant 0 : index
    %c0_20 = arith.constant 0 : index
    %42 = vector.load %arg6[%c0_19, %c0_20] : memref<1x256xf32, #tpu.memory_space<vmem>>, vector<1x256xf32>
    %cst_21 = arith.constant dense<0.000000e+00> : vector<1x256xf32>
    %43 = vector.multi_reduction <add>, %41, %cst_21 [0] : vector<2x1x256xf32> to vector<1x256xf32>
    %44 = arith.addf %42, %43 : vector<1x256xf32>
    %c0_22 = arith.constant 0 : index
    %c0_23 = arith.constant 0 : index
    %45 = vector.load %arg6[%c0_22, %c0_23] : memref<1x256xf32, #tpu.memory_space<vmem>>, vector<1x256xf32>
    tpu.vector_store %arg6[%c0_22, %c0_23], %44 {strides = array<i32>} : memref<1x256xf32, #tpu.memory_space<vmem>>, vector<1x256xf32>,
    %c0_i32_24 = arith.constant 0 : i32
    %46 = arith.cmpi eq, %arg1, %c0_i32_24 : i32
    %47 = arith.extui %46 : i1 to i32
    %c0_i32_25 = arith.constant 0 : i32
    %48 = arith.cmpi ne, %47, %c0_i32_25 : i32
    scf.if %48 {
      %c0_26 = arith.constant 0 : index
      %c0_27 = arith.constant 0 : index
      %49 = vector.load %arg6[%c0_26, %c0_27] : memref<1x256xf32, #tpu.memory_space<vmem>>, vector<1x256xf32>
      %50 = vector.shape_cast %49 : vector<1x256xf32> to vector<1x1x256xf32>
      %cst_28 = arith.constant dense<0.000000e+00> : vector<1xf32>
      %51 = vector.multi_reduction <add>, %50, %cst_28 [1, 2] : vector<1x1x256xf32> to vector<1xf32>
      %52 = vector.shape_cast %51 : vector<1xf32> to vector<1x1x1xf32>
      %53 = vector.extract %52[0, 0, 0] : f32 from vector<1x1x1xf32>
      %cst_29 = arith.constant 0.000000e+00 : f32
      %54 = vector.broadcast %cst_29 : f32 to vector<1x128xf32>
      %55 = vector.broadcast %53 : f32 to vector<1x128xf32>
      %56 = arith.addf %54, %55 : vector<1x128xf32>
      %c0_30 = arith.constant 0 : index
      %c0_31 = arith.constant 0 : index
      %57 = vector.load %arg5[%c0_30, %c0_31] : memref<1x128xf32, #tpu.memory_space<vmem>>, vector<1x128xf32>
      tpu.vector_store %arg5[%c0_30, %c0_31], %56 {strides = array<i32>} : memref<1x128xf32, #tpu.memory_space<vmem>>, vector<1x128xf32>,
    } else {
    }
    return
  }
  func.func @transform_0(%arg0: i32, %arg1: i32) -> (i32, i32, i32) {
    %c0_i32 = arith.constant 0 : i32
    %c0_i32_0 = arith.constant 0 : i32
    return %arg0, %c0_i32, %arg1 : i32, i32, i32
  }
  func.func @transform_1(%arg0: i32, %arg1: i32) -> (i32, i32, i32) {
    %c0_i32 = arith.constant 0 : i32
    %c0_i32_0 = arith.constant 0 : i32
    return %arg0, %c0_i32, %arg1 : i32, i32, i32
  }
  func.func @transform_2(%arg0: i32, %arg1: i32) -> (i32, i32, i32) {
    %c0_i32 = arith.constant 0 : i32
    %c0_i32_0 = arith.constant 0 : i32
    %c0_i32_1 = arith.constant 0 : i32
    %c0_i32_2 = arith.constant 0 : i32
    return %c0_i32, %c0_i32_0, %c0_i32_1 : i32, i32, i32
  }
  func.func @transform_3(%arg0: i32, %arg1: i32) -> (i32, i32) {
    %c0_i32 = arith.constant 0 : i32
    %c0_i32_0 = arith.constant 0 : i32
    return %c0_i32, %arg0 : i32, i32
  }
}

</mosaic_0001>

<llo_original>
// kernel: tpu_custom_call.1
$region0: #{tpu_custom_call.1}
  #allocation0 [shape = 'u32[]', space=smem, size = 0x4, offset = 0x4, fixed_abs, tag = 'smem constant byte address 0x4 - core index']
  #allocation1 [shape = 'u32[144,128]{1,0:T(1,128)}', space=vmem, size = 0x12000, scoped, tag = 'internal scratch']
  #allocation2 [shape = 'f32[1,256]{1,0:T(1,128)}', space=vmem, size = 0x400, scoped, tag = 'scratch operand']
  %s0 = inlined_call_operand.hbm [shape: f32[2,4,256], index: 0, kind: input, shape index: {}]
  %s1 = inlined_call_operand.vmem [shape: s32[2,1,256], index: 1, kind: input, shape index: {}]
  %s2 = inlined_call_operand.vmem [shape: f32[1,4,1], index: 2, kind: input, shape index: {}]
  %s3 = inlined_call_operand.hbm [shape: f32[1,128], index: 3, kind: output, shape index: {}]
  %s4 = sld [smem:[#allocation0]]
  $region34: #{tpu_custom_call.1} parent=0
    _
  %s6 = ssub.s32 1, %s4
  %s7 = scalar_select 0, %s6, %s4
  $region1: #{tpu_custom_call.1} parent=0
    #allocation3 [shape = 'u8[8192]{0}', space=vmem, size = 0x2000, scoped, tag = 'input window, operand 0, single buffered']
    #allocation4 [shape = 's32[1]{0}', space=sflag, size = 0x4, scoped, tag = 'scoped memory for tpu_custom_call.1']
    #allocation5 [shape = 's32[1]{0}', space=sflag, size = 0x4, scoped, tag = 'scoped memory for tpu_custom_call.1']
    #allocation6 [shape = 'u8[512]{0}', space=vmem, size = 0x400, scoped, tag = 'output window, operand 0, single buffered']
    %8 = vsyncpa [#allocation4], 0
    %9 = vsyncpa [#allocation5], 0
    // Predicated region
    $region2: #{tpu_custom_call.1} parent=1 // pred_check
      _
    $region3: #{tpu_custom_call.1} parent=1 // pred_check_branch
      %11 = sbr.rel (0) target = $region5
    $region4: #{tpu_custom_call.1} parent=1 // pred_region
      %s13 = ssub.s32 256, 256
      %14 = vsyncadd [#allocation4], %s13
      %s15 = sshll.u32 [#allocation3], 4
      %s16 = int_to_ptr.vmem [resolvable:$true] %s15
      %21 = dma.hbm_to_vmem [thread:$0]  %s0, 256, %s16, [#allocation4], 128, 128, 8
    $region5: #{tpu_custom_call.1} parent=1 // pred_fallthru
      _
    // Predicated region
    $region6: #{tpu_custom_call.1} parent=1 // pred_check
      _
    $region7: #{tpu_custom_call.1} parent=1 // pred_check_branch
      %23 = sbr.rel (0) target = $region9
    $region8: #{tpu_custom_call.1} parent=1 // pred_region
      _
    $region9: #{tpu_custom_call.1} parent=1 // pred_fallthru
      _
    // Predicated region
    $region10: #{tpu_custom_call.1} parent=1 // pred_check
      _
    $region11: #{tpu_custom_call.1} parent=1 // pred_check_branch
      %25 = sbr.rel (0) target = $region13
    $region12: #{tpu_custom_call.1} parent=1 // pred_region
      _
    $region13: #{tpu_custom_call.1} parent=1 // pred_fallthru
      _
    // Predicated region
    $region14: #{tpu_custom_call.1} parent=1 // pred_check
      _
    $region15: #{tpu_custom_call.1} parent=1 // pred_check_branch
      %27 = sbr.rel (0) target = $region17
    $region16: #{tpu_custom_call.1} parent=1 // pred_region
      %28 = dma.done [#allocation4], 256
    $region17: #{tpu_custom_call.1} parent=1 // pred_fallthru
      _
    %p29 = scmp.eq.s32.totalorder 0, 0
    // Predicated region
    $region18: #{tpu_custom_call.1} parent=1 // pred_check
      %p30 = pneg %p29
    $region19: #{tpu_custom_call.1} parent=1 // pred_check_branch
      %32 = sbr.rel (%p30) target = $region21
    $region20: #{tpu_custom_call.1} parent=1 // pred_region
      %v33 = vlaneseq
      %vm34 = vcmp.ge.s32.totalorder %v33, 0
      %vm35 = vcmp.lt.s32.totalorder %v33, 256
      %vm36 = vmand %vm34, %vm35
      %37 = vst.msk [vmem:[#allocation2] sm:$0x3] %vm36, 0.0
    $region21: #{tpu_custom_call.1} parent=1 // pred_fallthru
      _
    %v38 = vld [vmem:[#allocation3] sm:$0xff]
    %v39 = vld [vmem:[#allocation3 + $0x8] sm:$0xff]
    %v40 = vld [vmem:[%s1] sm:$0x3]
    %v41 = vld [vmem:[%s1 + $0x2] sm:$0x3]
    %v44 = vcombine.high %v38, %v38
    %v45 = vcombine.high %v39, %v39
    %vm48 = vcmask 1043456
    %v49 = vsel %vm48, %v38, -inf
    %v50 = vrot.slane %v49, 4
    %v51 = vmax.f32 %v49, %v50
    %v52 = vrot.slane %v51, 2
    %v53 = vmax.f32 %v51, %v52
    %v54 = vrot.slane %v53, 1
    %v55 = vmax.f32 %v53, %v54
    %v56 = vsel %vm48, %v44, -inf
    %v57 = vrot.slane %v56, 4
    %v58 = vmax.f32 %v56, %v57
    %v59 = vrot.slane %v58, 2
    %v60 = vmax.f32 %v58, %v59
    %v61 = vrot.slane %v60, 1
    %v62 = vmax.f32 %v60, %v61
    %v63 = vsel %vm48, %v39, -inf
    %v64 = vrot.slane %v63, 4
    %v65 = vmax.f32 %v63, %v64
    %v66 = vrot.slane %v65, 2
    %v67 = vmax.f32 %v65, %v66
    %v68 = vrot.slane %v67, 1
    %v69 = vmax.f32 %v67, %v68
    %v70 = vsel %vm48, %v45, -inf
    %v71 = vrot.slane %v70, 4
    %v72 = vmax.f32 %v70, %v71
    %v73 = vrot.slane %v72, 2
    %v74 = vmax.f32 %v72, %v73
    %v75 = vrot.slane %v74, 1
    %v76 = vmax.f32 %v74, %v75
    %v81 = vcombine.low %v55, %v62
    %v82 = vcombine.low %v69, %v76
    %v85 = vsub.f32 %v38, %v81
    %v86 = vsub.f32 %v39, %v82
    %v87 = vmul.f32 %v85, 1.442695
    %v88 = vpow.pop %v87
    %v89 = vmul.f32 %v86, 1.442695
    %v90 = vpow.pop %v89
    %v93 = vcombine.high %v88, %v88
    %v94 = vcombine.high %v90, %v90
    %v97 = vsel %vm48, %v88, 0.0
    %v98 = vrot.slane %v97, 4
    %v99 = vadd.f32 %v97, %v98
    %v100 = vrot.slane %v99, 2
    %v101 = vadd.f32 %v99, %v100
    %v102 = vrot.slane %v101, 1
    %v103 = vadd.f32 %v101, %v102
    %v104 = vsel %vm48, %v93, 0.0
    %v105 = vrot.slane %v104, 4
    %v106 = vadd.f32 %v104, %v105
    %v107 = vrot.slane %v106, 2
    %v108 = vadd.f32 %v106, %v107
    %v109 = vrot.slane %v108, 1
    %v110 = vadd.f32 %v108, %v109
    %v111 = vsel %vm48, %v90, 0.0
    %v112 = vrot.slane %v111, 4
    %v113 = vadd.f32 %v111, %v112
    %v114 = vrot.slane %v113, 2
    %v115 = vadd.f32 %v113, %v114
    %v116 = vrot.slane %v115, 1
    %v117 = vadd.f32 %v115, %v116
    %v118 = vsel %vm48, %v94, 0.0
    %v119 = vrot.slane %v118, 4
    %v120 = vadd.f32 %v118, %v119
    %v121 = vrot.slane %v120, 2
    %v122 = vadd.f32 %v120, %v121
    %v123 = vrot.slane %v122, 1
    %v124 = vadd.f32 %v122, %v123
    %v125 = vlaneseq
    %v126 = vshrl.u32 %v125, 7
    %v127 = vlaneseq
    %v128 = vshrl.u32 %v127, 7
    %v129 = vsub.s32 0, %v128
    %v130 = vrot.slane %v40, %v129
    %v131 = vlaneseq
    %v132 = vshrl.u32 %v131, 7
    %v133 = vsub.s32 1, %v132
    %v134 = vrot.slane %v40, %v133
    %v135 = vlaneseq
    %v136 = vshrl.u32 %v135, 7
    %v137 = vsub.s32 0, %v136
    %v138 = vrot.slane %v41, %v137
    %v139 = vlaneseq
    %v140 = vshrl.u32 %v139, 7
    %v141 = vsub.s32 1, %v140
    %v142 = vrot.slane %v41, %v141
    %vm143 = vcmp.eq.s32.totalorder %v126, %v130
    %vm144 = vcmp.eq.s32.totalorder %v126, %v134
    %vm145 = vcmp.eq.s32.totalorder %v126, %v138
    %vm146 = vcmp.eq.s32.totalorder %v126, %v142
    %v149 = vcombine.high %v85, %v85
    %v150 = vcombine.high %v86, %v86
    %v153 = vsel %vm143, %v85, 0.0
    %v154 = vsel %vm144, %v149, 0.0
    %v155 = vsel %vm145, %v86, 0.0
    %v156 = vsel %vm146, %v150, 0.0
    %v157 = vsel %vm48, %v153, 0.0
    %v158 = vrot.slane %v157, 4
    %v159 = vadd.f32 %v157, %v158
    %v160 = vrot.slane %v159, 2
    %v161 = vadd.f32 %v159, %v160
    %v162 = vrot.slane %v161, 1
    %v163 = vadd.f32 %v161, %v162
    %v164 = vsel %vm48, %v154, 0.0
    %v165 = vrot.slane %v164, 4
    %v166 = vadd.f32 %v164, %v165
    %v167 = vrot.slane %v166, 2
    %v168 = vadd.f32 %v166, %v167
    %v169 = vrot.slane %v168, 1
    %v170 = vadd.f32 %v168, %v169
    %v171 = vsel %vm48, %v155, 0.0
    %v172 = vrot.slane %v171, 4
    %v173 = vadd.f32 %v171, %v172
    %v174 = vrot.slane %v173, 2
    %v175 = vadd.f32 %v173, %v174
    %v176 = vrot.slane %v175, 1
    %v177 = vadd.f32 %v175, %v176
    %v178 = vsel %vm48, %v156, 0.0
    %v179 = vrot.slane %v178, 4
    %v180 = vadd.f32 %v178, %v179
    %v181 = vrot.slane %v180, 2
    %v182 = vadd.f32 %v180, %v181
    %v183 = vrot.slane %v182, 1
    %v184 = vadd.f32 %v182, %v183
    %v185 = vsel %vm143, %v88, 0.0
    %v186 = vsel %vm144, %v93, 0.0
    %v187 = vsel %vm145, %v90, 0.0
    %v188 = vsel %vm146, %v94, 0.0
    %v189 = vsel %vm48, %v185, 0.0
    %v190 = vrot.slane %v189, 4
    %v191 = vadd.f32 %v189, %v190
    %v192 = vrot.slane %v191, 2
    %v193 = vadd.f32 %v191, %v192
    %v194 = vrot.slane %v193, 1
    %v195 = vadd.f32 %v193, %v194
    %v196 = vsel %vm48, %v186, 0.0
    %v197 = vrot.slane %v196, 4
    %v198 = vadd.f32 %v196, %v197
    %v199 = vrot.slane %v198, 2
    %v200 = vadd.f32 %v198, %v199
    %v201 = vrot.slane %v200, 1
    %v202 = vadd.f32 %v200, %v201
    %v203 = vsel %vm48, %v187, 0.0
    %v204 = vrot.slane %v203, 4
    %v205 = vadd.f32 %v203, %v204
    %v206 = vrot.slane %v205, 2
    %v207 = vadd.f32 %v205, %v206
    %v208 = vrot.slane %v207, 1
    %v209 = vadd.f32 %v207, %v208
    %v210 = vsel %vm48, %v188, 0.0
    %v211 = vrot.slane %v210, 4
    %v212 = vadd.f32 %v210, %v211
    %v213 = vrot.slane %v212, 2
    %v214 = vadd.f32 %v212, %v213
    %v215 = vrot.slane %v214, 1
    %v216 = vadd.f32 %v214, %v215
    %v217 = vld [vmem:[%s2] sm:$0xf]
    %219 = vset.pattern.permute.xlu0 0
    %220 = vperm.xlu0 %219, %v217
    %v221 = vpop.permute.xlu0 %220
    %v223 = vsel %vm143, %v221, 0.0
    %v224 = vsel %vm144, %v221, 0.0
    %v225 = vsel %vm145, %v221, 0.0
    %v226 = vsel %vm146, %v221, 0.0
    %v227 = vsel %vm48, %v223, 0.0
    %v228 = vrot.slane %v227, 4
    %v229 = vadd.f32 %v227, %v228
    %v230 = vrot.slane %v229, 2
    %v231 = vadd.f32 %v229, %v230
    %v232 = vrot.slane %v231, 1
    %v233 = vadd.f32 %v231, %v232
    %v234 = vsel %vm48, %v224, 0.0
    %v235 = vrot.slane %v234, 4
    %v236 = vadd.f32 %v234, %v235
    %v237 = vrot.slane %v236, 2
    %v238 = vadd.f32 %v236, %v237
    %v239 = vrot.slane %v238, 1
    %v240 = vadd.f32 %v238, %v239
    %v241 = vsel %vm48, %v225, 0.0
    %v242 = vrot.slane %v241, 4
    %v243 = vadd.f32 %v241, %v242
    %v244 = vrot.slane %v243, 2
    %v245 = vadd.f32 %v243, %v244
    %v246 = vrot.slane %v245, 1
    %v247 = vadd.f32 %v245, %v246
    %v248 = vsel %vm48, %v226, 0.0
    %v249 = vrot.slane %v248, 4
    %v250 = vadd.f32 %v248, %v249
    %v251 = vrot.slane %v250, 2
    %v252 = vadd.f32 %v250, %v251
    %v253 = vrot.slane %v252, 1
    %v254 = vadd.f32 %v252, %v253
    %v255 = vlog2.pop %v103
    %v256 = vmul.f32 %v255, 0.6931472
    %v257 = vlog2.pop %v110
    %v258 = vmul.f32 %v257, 0.6931472
    %v259 = vlog2.pop %v117
    %v260 = vmul.f32 %v259, 0.6931472
    %v261 = vlog2.pop %v124
    %v262 = vmul.f32 %v261, 0.6931472
    %v263 = vsub.f32 %v163, %v256
    %v264 = vsub.f32 %v170, %v258
    %v265 = vsub.f32 %v177, %v260
    %v266 = vsub.f32 %v184, %v262
    %v267 = vrcp.pop %v103
    %v268 = vmul.f32 %v195, %v267
    %v269 = vrcp.pop %v110
    %v270 = vmul.f32 %v202, %v269
    %v271 = vrcp.pop %v117
    %v272 = vmul.f32 %v209, %v271
    %v273 = vrcp.pop %v124
    %v274 = vmul.f32 %v216, %v273
    %v275 = vsub.f32 1.0, %v268
    %v276 = vsub.f32 1.0, %v270
    %v277 = vsub.f32 1.0, %v272
    %v278 = vsub.f32 1.0, %v274
    %v279 = vmul.f32 %v275, %v275
    %v280 = vmul.f32 %v276, %v276
    %v281 = vmul.f32 %v277, %v277
    %v282 = vmul.f32 %v278, %v278
    %v283 = vsub.f32 0.0, %v233
    %v284 = vsub.f32 0.0, %v240
    %v285 = vsub.f32 0.0, %v247
    %v286 = vsub.f32 0.0, %v254
    %v287 = vmul.f32 %v283, %v279
    %v288 = vmul.f32 %v284, %v280
    %v289 = vmul.f32 %v285, %v281
    %v290 = vmul.f32 %v286, %v282
    %v291 = vmul.f32 %v287, %v263
    %v292 = vmul.f32 %v288, %v264
    %v293 = vmul.f32 %v289, %v265
    %v294 = vmul.f32 %v290, %v266
    %v295 = vld [vmem:[#allocation2] sm:$0x3]
    %v296 = vadd.f32 %v291, %v293
    %v297 = vadd.f32 %v292, %v294
    %v300 = vcombine.low %v296, %v297
    %v302 = vunpack.c.l.s4 1966171168
    %v303 = vunpack.c.0.s8 %v302
    %v304 = vlaneseq
    %v305 = vshrl.u32 %v304, 7
    %v306 = vsub.s32 %v303, %v305
    %v307 = vrot.slane %v300, %v306
    %v309 = vunpack.c.l.s4 1966171168
    %v310 = vunpack.c.0.s8 %v309
    %v311 = vlaneseq
    %v312 = vshrl.u32 %v311, 7
    %v313 = vsub.s32 %v310, %v312
    %v314 = vrot.slane %v307, %v313
    %v316 = vadd.f32 %v295, %v314
    %v317 = vlaneseq
    %vm318 = vcmp.ge.s32.totalorder %v317, 0
    %vm319 = vcmp.lt.s32.totalorder %v317, 256
    %vm320 = vmand %vm318, %vm319
    %321 = vst.msk [vmem:[#allocation2] sm:$0x3] %vm320, %v316
    // Predicated region
    $region22: #{tpu_custom_call.1} parent=1 // pred_check
      %p322 = pneg %p29
    $region23: #{tpu_custom_call.1} parent=1 // pred_check_branch
      %324 = sbr.rel (%p322) target = $region25
    $region24: #{tpu_custom_call.1} parent=1 // pred_region
      %v325 = vld [vmem:[#allocation2] sm:$0x3]
      %v327 = vlaneseq
      %v328 = vshrl.u32 %v327, 7
      %v329 = vsub.s32 0, %v328
      %v330 = vrot.slane %v325, %v329
      %v331 = vlaneseq
      %v332 = vshrl.u32 %v331, 7
      %v333 = vsub.s32 1, %v332
      %v334 = vrot.slane %v325, %v333
      %vm337 = vcmask 1040384
      %v338 = vsel %vm337, %v330, 0.0
      %v339 = vsel %vm337, %v334, 0.0
      %v340 = vadd.f32 %v338, %v339
      %341 = vadd.xlane.f32.xlu0 %v340
      %v342 = vpop.xlane.xlu0 %341
      %v343 = vrot.slane %v342, 4
      %v344 = vadd.f32 %v342, %v343
      %v345 = vrot.slane %v344, 2
      %v346 = vadd.f32 %v344, %v345
      %v347 = vrot.slane %v346, 1
      %v348 = vadd.f32 %v346, %v347
      %s349 = vtos %v348
      %v350 = vstv %s349
      %v351 = vadd.f32 %v350, 0.0
      %352 = vst [vmem:[#allocation6] sm:$0x1] %v351
    $region25: #{tpu_custom_call.1} parent=1 // pred_fallthru
      _
    // Predicated region
    $region26: #{tpu_custom_call.1} parent=1 // pred_check
      _
    $region27: #{tpu_custom_call.1} parent=1 // pred_check_branch
      %354 = sbr.rel (0) target = $region29
    $region28: #{tpu_custom_call.1} parent=1 // pred_region
      %s356 = ssub.s32 16, 16
      %357 = vsyncadd [#allocation5], %s356
      %s359 = sshll.u32 [#allocation6], 4
      %s360 = int_to_ptr.vmem [resolvable:$true] %s359
      %362 = dma.vmem_to_hbm [thread:$0]  %s360, 16, %s3, [#allocation5]
    $region29: #{tpu_custom_call.1} parent=1 // pred_fallthru
      _
    // Predicated region
    $region30: #{tpu_custom_call.1} parent=1 // pred_check
      _
    $region31: #{tpu_custom_call.1} parent=1 // pred_check_branch
      %364 = sbr.rel (0) target = $region33
    $region32: #{tpu_custom_call.1} parent=1 // pred_region
      %365 = dma.done [#allocation5], 16
    $region33: #{tpu_custom_call.1} parent=1 // pred_fallthru
      _
    %366 = vsyncpa [#allocation4], 1
    %367 = vsyncpa [#allocation5], 1

</llo_original>
